<compile_context>
chip_gen: v5e
topology: v5e:2x2
jax: 0.10.0
libtpu: 0.0.40
codegen_flags: <defaults>
</compile_context>

<pallas_src>
import functools

import jax
import jax.numpy as jnp
from jax.experimental import pallas as pl
from jax.experimental.pallas import tpu as pltpu


def _round_up(a: int, m: int) -> int:
    return -(-a // m) * m


# -----------------------------------------------------------------------------
# Kernel
# -----------------------------------------------------------------------------
def mdn_fused_kernel(x_ref, w_ref, b_ref, out_ref, *, pi_pad, go_pad):
    """One fused MDN head tile.

    x_ref  : (TB, D)  f32
    w_ref  : (D, N)   bf16   columns: [pi | pad->128 | sigma | pad | mu | pad]
    b_ref  : (1, N)   f32    (pi padding lanes biased to -1e30)
    out_ref: (TB, N)  f32
    """
    x = x_ref[...].astype(jnp.bfloat16)                       # bf16 MXU operands
    y = jnp.dot(x, w_ref[...],
                preferred_element_type=jnp.float32) + b_ref[...]   # (TB, N) f32

    # --- pi: softmax over the first pi_pad lanes (static, lane-aligned slice).
    # Padding lanes carry a -1e30 bias -> exp(pad - m) == 0, so they never
    # pollute the normalization.
    pi_logits = y[:, :pi_pad]
    m = jnp.max(pi_logits, axis=-1, keepdims=True)
    e = jnp.exp(pi_logits - m)
    denom = jnp.sum(e, axis=-1, keepdims=True)
    out_ref[:, :pi_pad] = e / denom                           # exact: rows sum to 1

    # --- sigma: exp restricted to its own lane range only.
    out_ref[:, pi_pad:pi_pad + go_pad] = jnp.exp(y[:, pi_pad:pi_pad + go_pad])

    # --- mu: identity.
    out_ref[:, pi_pad + go_pad:] = y[:, pi_pad + go_pad:]


# -----------------------------------------------------------------------------
# One-time parameter fusion (hoisted out of the per-call forward)
# -----------------------------------------------------------------------------
def fuse_mdn_params(params, num_gaussians, out_features):
    """Concat + lane-align + bf16-cast the three heads. Call once, reuse."""
    wpi, bpi, wsig, bsig, wmu, bmu = params
    D = wpi.shape[0]
    G, O = num_gaussians, out_features
    GO = G * O
    pi_pad = _round_up(G, 128)          # pi head starts at lane 0
    go_pad = _round_up(GO, 128)         # sigma / mu each start on a 128 boundary
    n_pad = pi_pad + 2 * go_pad

    def pad_cols(a, width):
        return jnp.pad(a, ((0, 0), (0, width - a.shape[1])))

    w_fused = jnp.concatenate(
        [pad_cols(wpi, pi_pad), pad_cols(wsig, go_pad), pad_cols(wmu, go_pad)],
        axis=1).astype(jnp.bfloat16)                          # (D, n_pad) bf16

    b_fused = jnp.concatenate(
        [jnp.pad(bpi, ((0, 0), (0, pi_pad - G)), constant_values=-1e30),
         pad_cols(bsig, go_pad), pad_cols(bmu, go_pad)],
        axis=1).astype(jnp.float32)                           # (1, n_pad) f32

    meta = dict(D=D, G=G, O=O, GO=GO, pi_pad=pi_pad, go_pad=go_pad, n_pad=n_pad)
    return w_fused, b_fused, meta


# -----------------------------------------------------------------------------
# Forward wrapper
# -----------------------------------------------------------------------------
def _choose_tb(B):
    TB_MAX = 1024                      # overhead-bound regime: big batch tiles
    if B <= 8:
        return 8
    # Guarantee >= 2 grid steps for mid-sized B so the "parallel" batch axis
    # can be split across the 2 TensorCores on v7x (neutral on v5e/v6e).
    return min(TB_MAX, _round_up(-(-B // 2), 8))


def mdn_forward(x, w_fused, b_fused, meta):
    """x: (B, D) float32. Returns (pi (B,G), sigma (B,G,O), mu (B,G,O))."""
    B, D = x.shape
    assert D == meta["D"]
    G, O, GO = meta["G"], meta["O"], meta["GO"]
    pi_pad, go_pad, n_pad = meta["pi_pad"], meta["go_pad"], meta["n_pad"]

    TB = _choose_tb(B)
    B_pad = _round_up(B, TB)
    x_pad = jnp.pad(x, ((0, B_pad - B), (0, 0))) if B_pad != B else x
    grid = (B_pad // TB,)

    # VMEM: double-buffered x/out tiles + (conservatively double-counted)
    # resident weight/bias; capped at 32 MiB for the 64 MiB v7x part.
    tile_bytes = (2 * TB * D * 4 + 2 * TB * n_pad * 4
                  + 2 * D * n_pad * 2 + 2 * n_pad * 4)
    vmem_limit = int(min(32 * 2 ** 20, max(tile_bytes + (2 << 20), 8 * 2 ** 20)))

    cost = pl.CostEstimate(
        flops=2 * B_pad * D * n_pad,
        transcendentals=B_pad * (pi_pad + go_pad),
        bytes_accessed=(x_pad.size * 4 + w_fused.size * 2
                        + b_fused.size * 4 + B_pad * n_pad * 4),
    )

    kernel = functools.partial(mdn_fused_kernel, pi_pad=pi_pad, go_pad=go_pad)

    out = pl.pallas_call(
        kernel,
        out_shape=jax.ShapeDtypeStruct((B_pad, n_pad), jnp.float32),
        grid_spec=pltpu.PrefetchScalarGridSpec(
            num_scalar_prefetch=0,
            grid=grid,
            in_specs=[
                pl.BlockSpec((TB, D), lambda i: (i, 0)),      # x tile per step
                pl.BlockSpec((D, n_pad), lambda i: (0, 0)),   # weight resident
                pl.BlockSpec((1, n_pad), lambda i: (0, 0)),   # bias resident
            ],
            out_specs=pl.BlockSpec((TB, n_pad), lambda i: (i, 0)),
        ),
        compiler_params=pltpu.CompilerParams(
            dimension_semantics=("parallel",),
            vmem_limit_bytes=vmem_limit,
        ),
        cost_estimate=cost,
    )(x_pad, w_fused, b_fused)

    out = out[:B]
    pi = out[:, :G]                                            # lane offset 0
    sigma = out[:, pi_pad:pi_pad + GO].reshape(B, G, O)        # 128-aligned offset
    mu = out[:, pi_pad + go_pad:pi_pad + go_pad + GO].reshape(B, G, O)
    return pi, sigma, mu


# -----------------------------------------------------------------------------
# Init + pure-JAX reference
# -----------------------------------------------------------------------------
def init_params(key, in_features, out_features, num_gaussians):
    """Deterministic synthetic init (PyTorch-Linear-style uniform bounds)."""
    D, G, O = in_features, num_gaussians, out_features
    bound = 1.0 / (D ** 0.5)
    ks = jax.random.split(key, 6)
    # Weights stored as (in, out) so the kernel computes x @ W directly.
    wpi = jax.random.uniform(ks[0], (D, G), jnp.float32, -bound, bound)
    bpi = jax.random.uniform(ks[1], (1, G), jnp.float32, -bound, bound)
    wsig = jax.random.uniform(ks[2], (D, G * O), jnp.float32, -bound, bound)
    bsig = jax.random.uniform(ks[3], (1, G * O), jnp.float32, -bound, bound)
    wmu = jax.random.uniform(ks[4], (D, G * O), jnp.float32, -bound, bound)
    bmu = jax.random.uniform(ks[5], (1, G * O), jnp.float32, -bound, bound)
    return (wpi, bpi, wsig, bsig, wmu, bmu)


def mdn_reference(x, params, num_gaussians, out_features):
    """Pure-JAX f32 reference (same math as the PyTorch module)."""
    wpi, bpi, wsig, bsig, wmu, bmu = params
    B = x.shape[0]
    pi = jax.nn.softmax(x @ wpi + bpi, axis=1)
    sigma = jnp.exp(x @ wsig + bsig).reshape(B, num_gaussians, out_features)
    mu = (x @ wmu + bmu).reshape(B, num_gaussians, out_features)
    return pi, sigma, mu


if __name__ == "__main__":
    in_features = 32
    out_features = 2
    num_gaussians = 4
    batch = 8

    key = jax.random.PRNGKey(0)
    kx, kp = jax.random.split(key)
    x = jax.random.normal(kx, (batch, in_features), jnp.float32)
    params = init_params(kp, in_features, out_features, num_gaussians)

    # Fuse weights once (not per forward).
    w_fused, b_fused, meta = fuse_mdn_params(params, num_gaussians, out_features)

    pi, sigma, mu = mdn_forward(x, w_fused, b_fused, meta)
    jax.block_until_ready((pi, sigma, mu))

    pi_r, sigma_r, mu_r = mdn_reference(x, params, num_gaussians, out_features)
    assert pi.shape == (batch, num_gaussians)
    assert sigma.shape == (batch, num_gaussians, out_features)
    assert mu.shape == (batch, num_gaussians, out_features)
    # Kernel matmul runs in bf16 (f32 accumulation); compare with loose tolerance
    # against the f32 reference, plus a tight check that pi rows normalize
    # (exact divide -> sums are 1 to f32 precision).
    assert jnp.allclose(pi, pi_r, atol=2e-2, rtol=2e-2)
    assert jnp.allclose(sigma, sigma_r, atol=2e-2, rtol=2e-2)
    assert jnp.allclose(mu, mu_r, atol=2e-2, rtol=2e-2)
    assert jnp.allclose(jnp.sum(pi, axis=-1), jnp.ones((batch,)), atol=1e-3)

    print("KERNEL_OK")
</pallas_src>

<mosaic_0001>
module attributes {stable_mosaic.version = 11 : i64} {
  func.func @mdn_fused_kernel(%arg0: i32, %arg1: memref<8x32xf32, #tpu.memory_space<vmem>>, %arg2: memref<32x384xbf16, #tpu.memory_space<vmem>>, %arg3: memref<1x384xf32, #tpu.memory_space<vmem>>, %arg4: memref<8x384xf32, #tpu.memory_space<vmem>>) attributes {dimension_semantics = [#tpu.dimension_semantics<parallel>], iteration_bounds = array<i64: 1>, scalar_prefetch = 0 : i64, scratch_operands = 0 : i64, tpu.core_type = #tpu.core_type<tc>, window_params = [{transform_indices = @transform_0, window_bounds = array<i64: 8, 32>}, {pipeline_mode = #tpu.pipeline_mode<synchronous>, transform_indices = @transform_1, window_bounds = array<i64: 32, 384>}, {pipeline_mode = #tpu.pipeline_mode<synchronous>, transform_indices = @transform_2, window_bounds = array<i64: 1, 384>}, {transform_indices = @transform_3, window_bounds = array<i64: 8, 384>}]} {
    %c0 = arith.constant 0 : index
    %c0_0 = arith.constant 0 : index
    %0 = vector.load %arg1[%c0, %c0_0] : memref<8x32xf32, #tpu.memory_space<vmem>>, vector<8x32xf32>
    %1 = arith.truncf %0 : vector<8x32xf32> to vector<8x32xbf16>
    %c0_1 = arith.constant 0 : index
    %c0_2 = arith.constant 0 : index
    %2 = vector.load %arg2[%c0_1, %c0_2] : memref<32x384xbf16, #tpu.memory_space<vmem>>, vector<32x384xbf16>
    %cst = arith.constant dense<0.000000e+00> : vector<8x384xf32>
    %3 = tpu.matmul %1, %2, %cst {dimension_numbers = #tpu.dot_dimension_numbers<[1], [0], [0], [1], [0, 0, 1, 1], [], []>} : vector<8x32xbf16>, vector<32x384xbf16>, vector<8x384xf32> -> vector<8x384xf32>
    %c0_3 = arith.constant 0 : index
    %c0_4 = arith.constant 0 : index
    %4 = vector.load %arg3[%c0_3, %c0_4] : memref<1x384xf32, #tpu.memory_space<vmem>>, vector<1x384xf32>
    %5 = vector.broadcast %4 : vector<1x384xf32> to vector<8x384xf32>
    %6 = arith.addf %3, %5 : vector<8x384xf32>
    %7 = vector.extract_strided_slice %6 {offsets = [0, 0], sizes = [8, 128], strides = [1, 1]} : vector<8x384xf32> to vector<8x128xf32>
    %cst_5 = arith.constant dense<0xFF800000> : vector<8xf32>
    %8 = vector.multi_reduction <maximumf>, %7, %cst_5 [1] : vector<8x128xf32> to vector<8xf32>
    %9 = vector.shape_cast %8 : vector<8xf32> to vector<8x1xf32>
    %10 = vector.broadcast %9 : vector<8x1xf32> to vector<8x128xf32>
    %11 = arith.subf %7, %10 : vector<8x128xf32>
    %12 = math.exp %11 : vector<8x128xf32>
    %cst_6 = arith.constant dense<0.000000e+00> : vector<8xf32>
    %13 = vector.multi_reduction <add>, %12, %cst_6 [1] : vector<8x128xf32> to vector<8xf32>
    %14 = vector.shape_cast %13 : vector<8xf32> to vector<8x1xf32>
    %15 = vector.broadcast %14 : vector<8x1xf32> to vector<8x128xf32>
    %16 = arith.divf %12, %15 : vector<8x128xf32>
    %c0_7 = arith.constant 0 : index
    %c0_8 = arith.constant 0 : index
    %17 = vector.load %arg4[%c0_7, %c0_8] : memref<8x384xf32, #tpu.memory_space<vmem>>, vector<8x128xf32>
    tpu.vector_store %arg4[%c0_7, %c0_8], %16 {strides = array<i32>} : memref<8x384xf32, #tpu.memory_space<vmem>>, vector<8x128xf32>,
    %18 = vector.extract_strided_slice %6 {offsets = [0, 128], sizes = [8, 128], strides = [1, 1]} : vector<8x384xf32> to vector<8x128xf32>
    %19 = math.exp %18 : vector<8x128xf32>
    %c0_9 = arith.constant 0 : index
    %c128 = arith.constant 128 : index
    %20 = vector.load %arg4[%c0_9, %c128] : memref<8x384xf32, #tpu.memory_space<vmem>>, vector<8x128xf32>
    tpu.vector_store %arg4[%c0_9, %c128], %19 {strides = array<i32>} : memref<8x384xf32, #tpu.memory_space<vmem>>, vector<8x128xf32>,
    %21 = vector.extract_strided_slice %6 {offsets = [0, 256], sizes = [8, 128], strides = [1, 1]} : vector<8x384xf32> to vector<8x128xf32>
    %c0_10 = arith.constant 0 : index
    %c256 = arith.constant 256 : index
    %22 = vector.load %arg4[%c0_10, %c256] : memref<8x384xf32, #tpu.memory_space<vmem>>, vector<8x128xf32>
    tpu.vector_store %arg4[%c0_10, %c256], %21 {strides = array<i32>} : memref<8x384xf32, #tpu.memory_space<vmem>>, vector<8x128xf32>,
    return
  }
  func.func @transform_0(%arg0: i32) -> (i32, i32) {
    %c0_i32 = arith.constant 0 : i32
    %c0_i32_0 = arith.constant 0 : i32
    return %arg0, %c0_i32 : i32, i32
  }
  func.func @transform_1(%arg0: i32) -> (i32, i32) {
    %c0_i32 = arith.constant 0 : i32
    %c0_i32_0 = arith.constant 0 : i32
    %c0_i32_1 = arith.constant 0 : i32
    return %c0_i32, %c0_i32_0 : i32, i32
  }
  func.func @transform_2(%arg0: i32) -> (i32, i32) {
    %c0_i32 = arith.constant 0 : i32
    %c0_i32_0 = arith.constant 0 : i32
    %c0_i32_1 = arith.constant 0 : i32
    return %c0_i32, %c0_i32_0 : i32, i32
  }
  func.func @transform_3(%arg0: i32) -> (i32, i32) {
    %c0_i32 = arith.constant 0 : i32
    %c0_i32_0 = arith.constant 0 : i32
    return %arg0, %c0_i32 : i32, i32
  }
}

</mosaic_0001>

<llo_original>
// kernel: tpu_custom_call.1
$region0: #{tpu_custom_call.1}
  #allocation0 [shape = 'u32[]', space=smem, size = 0x4, offset = 0x4, fixed_abs, tag = 'smem constant byte address 0x4 - core index']
  #allocation1 [shape = 'u32[72,128]{1,0:T(1,128)}', space=vmem, size = 0x9000, scoped, tag = 'internal scratch']
  %s0 = inlined_call_operand.hbm [shape: f32[8,32], index: 0, kind: input, shape index: {}]
  %s1 = inlined_call_operand.hbm [shape: bf16[32,384], index: 1, kind: input, shape index: {}]
  %s2 = inlined_call_operand.hbm [shape: f32[1,384], index: 2, kind: input, shape index: {}]
  %s3 = inlined_call_operand.hbm [shape: f32[8,384], index: 3, kind: output, shape index: {}]
  %s4 = sld [smem:[#allocation0]]
  $region34: #{tpu_custom_call.1} parent=0
    _
  %s6 = ssub.s32 1, %s4
  %s7 = scalar_select 0, %s6, %s4
  $region1: #{tpu_custom_call.1} parent=0
    #allocation2 [shape = 'u8[4096]{0}', space=vmem, size = 0x1000, scoped, tag = 'input window, operand 0, single buffered']
    #allocation3 [shape = 's32[1]{0}', space=sflag, size = 0x4, scoped, tag = 'scoped memory for tpu_custom_call.1']
    #allocation4 [shape = 's32[1]{0}', space=sflag, size = 0x4, scoped, tag = 'scoped memory for tpu_custom_call.1']
    #allocation5 [shape = 'u8[24576]{0}', space=vmem, size = 0x6000, scoped, tag = 'input window, operand 1, single buffered']
    #allocation6 [shape = 's32[1]{0}', space=sflag, size = 0x4, scoped, tag = 'scoped memory for tpu_custom_call.1']
    #allocation7 [shape = 'u8[1536]{0}', space=vmem, size = 0x800, scoped, tag = 'input window, operand 2, single buffered']
    #allocation8 [shape = 'u8[12288]{0}', space=vmem, size = 0x3000, scoped, tag = 'output window, operand 0, single buffered']
    %8 = vsyncpa [#allocation3], 0
    %9 = vsyncpa [#allocation6], 0
    %10 = vsyncpa [#allocation4], 0
    // Predicated region
    $region2: #{tpu_custom_call.1} parent=1 // pred_check
      _
    $region3: #{tpu_custom_call.1} parent=1 // pred_check_branch
      %12 = sbr.rel (0) target = $region5
    $region4: #{tpu_custom_call.1} parent=1 // pred_region
      %14 = vsyncadd [#allocation3], 0
      %s16 = sshll.u32 %s0, 4
      %s17 = int_to_ptr.hbm [resolvable:$true] %s16
      %s18 = sshll.u32 [#allocation2], 4
      %s19 = int_to_ptr.vmem [resolvable:$true] %s18
      %21 = dma.hbm_to_vmem [thread:$0]  %s17, 128, %s19, [#allocation3]
    $region5: #{tpu_custom_call.1} parent=1 // pred_fallthru
      _
    // Predicated region
    $region6: #{tpu_custom_call.1} parent=1 // pred_check
      _
    $region7: #{tpu_custom_call.1} parent=1 // pred_check_branch
      %23 = sbr.rel (0) target = $region9
    $region8: #{tpu_custom_call.1} parent=1 // pred_region
      %25 = vsyncadd [#allocation6], 0
      %s26 = sshll.u32 %s1, 4
      %s27 = int_to_ptr.hbm [resolvable:$true] %s26
      %s28 = sshll.u32 [#allocation5], 4
      %s29 = int_to_ptr.vmem [resolvable:$true] %s28
      %34 = dma.hbm_to_vmem [thread:$0]  %s27, 768, %s29, [#allocation6], 192, 192, 12
    $region9: #{tpu_custom_call.1} parent=1 // pred_fallthru
      _
    // Predicated region
    $region10: #{tpu_custom_call.1} parent=1 // pred_check
      _
    $region11: #{tpu_custom_call.1} parent=1 // pred_check_branch
      %36 = sbr.rel (0) target = $region13
    $region12: #{tpu_custom_call.1} parent=1 // pred_region
      %38 = vsyncadd [#allocation6], 0
      %s40 = sshll.u32 %s2, 4
      %s41 = int_to_ptr.hbm [resolvable:$true] %s40
      %s42 = sshll.u32 [#allocation7], 4
      %s43 = int_to_ptr.vmem [resolvable:$true] %s42
      %45 = dma.hbm_to_vmem [thread:$0]  %s41, 48, %s43, [#allocation6]
    $region13: #{tpu_custom_call.1} parent=1 // pred_fallthru
      _
    // Predicated region
    $region14: #{tpu_custom_call.1} parent=1 // pred_check
      _
    $region15: #{tpu_custom_call.1} parent=1 // pred_check_branch
      %47 = sbr.rel (0) target = $region17
    $region16: #{tpu_custom_call.1} parent=1 // pred_region
      %49 = dma.done [#allocation3], 128
    $region17: #{tpu_custom_call.1} parent=1 // pred_fallthru
      _
    // Predicated region
    $region18: #{tpu_custom_call.1} parent=1 // pred_check
      _
    $region19: #{tpu_custom_call.1} parent=1 // pred_check_branch
      %51 = sbr.rel (0) target = $region21
    $region20: #{tpu_custom_call.1} parent=1 // pred_region
      %53 = dma.done [#allocation6], 768
    $region21: #{tpu_custom_call.1} parent=1 // pred_fallthru
      _
    // Predicated region
    $region22: #{tpu_custom_call.1} parent=1 // pred_check
      _
    $region23: #{tpu_custom_call.1} parent=1 // pred_check_branch
      %55 = sbr.rel (0) target = $region25
    $region24: #{tpu_custom_call.1} parent=1 // pred_region
      %57 = dma.done [#allocation6], 48
    $region25: #{tpu_custom_call.1} parent=1 // pred_fallthru
      _
    %v59 = vld [vmem:[#allocation2] sm:$0xff]
    %v60 = vpack.c.bf16 %v59, %v59
    %v61 = vld [vmem:[#allocation5] sm:$0xff]
    %v62 = vld [vmem:[#allocation5 + $0x8] sm:$0xf]
    %v63 = vld [vmem:[#allocation5 + $0xc] sm:$0xff]
    %v64 = vld [vmem:[#allocation5 + $0x14] sm:$0xf]
    %v65 = vld [vmem:[#allocation5 + $0x18] sm:$0xff]
    %v66 = vld [vmem:[#allocation5 + $0x20] sm:$0xf]
    %v67 = vld [vmem:[#allocation5 + $0x24] sm:$0xff]
    %v68 = vld [vmem:[#allocation5 + $0x2c] sm:$0xf]
    %v69 = vld [vmem:[#allocation7] sm:$0x7]
    %v71 = vperm.slane %v69, 0
    %v72 = vperm.slane %v69, 1
    %v73 = vperm.slane %v69, 2
    %v85 = vunpack.c.l.b16 %v61
    %v86 = vunpack.c.h.b16 %v61
    %v87 = vunpack.c.l.b16 %v62
    %v88 = vunpack.c.l.b16 %v63
    %v89 = vunpack.c.h.b16 %v63
    %v90 = vunpack.c.l.b16 %v64
    %v91 = vunpack.c.l.b16 %v65
    %v92 = vunpack.c.h.b16 %v65
    %v93 = vunpack.c.l.b16 %v66
    %v94 = vunpack.c.l.b16 %v67
    %v95 = vunpack.c.h.b16 %v67
    %v96 = vunpack.c.l.b16 %v68
    %v97 = vpack.c.b16 %v88, %v85
    %v98 = vpack.c.b16 %v89, %v86
    %v99 = vpack.c.b16 %v90, %v87
    %v100 = vpack.c.b16 %v94, %v91
    %v101 = vpack.c.b16 %v95, %v92
    %v102 = vpack.c.b16 %v96, %v93
    %vm109 = vcmask 261120
    %v111 = vsel %vm109, %v60, 0
    %113 = vmatpush.bf16.msra.mxu0 0
    %114 = vmatpush.bf16.msra.mxu0 0
    %115 = vmatpush.bf16.msra.mxu0 0
    %116 = vmatpush.bf16.msra.mxu0 0
    %117 = vmatpush.bf16.msra.mxu0 0
    %118 = vmatpush.bf16.msra.mxu0 0
    %119 = vmatpush.bf16.msra.mxu0 %v100
    %120 = vmatpush.bf16.msra.mxu0 %v97
    %121 = vmatmul.bf16.gmra.mxu0 %v111
    %v122 = vpop.f32.mrf.mxu0
    %v123 = vadd.f32 %v71, %v122
    %v124 = vpop.f32.mrf.mxu0
    %125 = vdwg.mxu0
    %126 = vmatpush.bf16.msra.mxu0 0
    %127 = vmatpush.bf16.msra.mxu0 0
    %128 = vmatpush.bf16.msra.mxu0 0
    %129 = vmatpush.bf16.msra.mxu0 0
    %130 = vmatpush.bf16.msra.mxu0 0
    %131 = vmatpush.bf16.msra.mxu0 0
    %132 = vmatpush.bf16.msra.mxu0 %v101
    %133 = vmatpush.bf16.msra.mxu0 %v98
    %134 = vmatmul.bf16.gmra.mxu0 %v111
    %v135 = vpop.f32.mrf.mxu0
    %v136 = vadd.f32 %v72, %v135
    %v137 = vpop.f32.mrf.mxu0
    %138 = vdwg.mxu0
    %139 = vmatpush.bf16.msra.mxu0 0
    %140 = vmatpush.bf16.msra.mxu0 0
    %141 = vmatpush.bf16.msra.mxu0 0
    %142 = vmatpush.bf16.msra.mxu0 0
    %143 = vmatpush.bf16.msra.mxu0 0
    %144 = vmatpush.bf16.msra.mxu0 0
    %145 = vmatpush.bf16.msra.mxu0 %v102
    %146 = vmatpush.bf16.msra.mxu0 %v99
    %147 = vmatmul.bf16.gmra.mxu0 %v111
    %v148 = vpop.f32.mrf.mxu0
    %v149 = vadd.f32 %v73, %v148
    %v150 = vpop.f32.mrf.mxu0
    %151 = vdwg.mxu0
    %152 = vmax.xlane.f32.xlu0 %v123
    %v153 = vpop.xlane.xlu0 %152
    %v154 = vsub.f32 %v123, %v153
    %v155 = vmul.f32 %v154, 1.442695
    %v156 = vpow.pop %v155
    %157 = vadd.xlane.f32.xlu0 %v156
    %v158 = vpop.xlane.xlu0 %157
    %v159 = vrcp.pop %v158
    %v160 = vmul.f32 %v158, %v159
    %v161 = vsub.f32 1.0, %v160
    %v162 = vmul.f32 %v159, %v161
    %v163 = vadd.f32 %v159, %v162
    %vm164 = vweird.f32 %v158
    %vm165 = vweird.f32 %v159
    %vm166 = vmor %vm164, %vm165
    %v167 = vsel %vm166, %v159, %v163
    %v168 = vand.u32 2147483647, %v158
    %vm169 = vcmp.eq.f32.partialorder %v168, 8.507059e+37
    %v170 = vand.u32 %v158, 2147483648
    %v171 = vor.u32 1.1754944e-38, %v170
    %v172 = vsel %vm169, %v171, %v167
    %v173 = vmul.f32 %v156, %v172
    %174 = vst [vmem:[#allocation8] sm:$0xff] %v173
    %v175 = vmul.f32 %v136, 1.442695
    %v176 = vpow.pop %v175
    %177 = vst [vmem:[#allocation8 + $0x8] sm:$0xff] %v176
    %178 = vst [vmem:[#allocation8 + $0x10] sm:$0xff] %v149
    // Predicated region
    $region26: #{tpu_custom_call.1} parent=1 // pred_check
      _
    $region27: #{tpu_custom_call.1} parent=1 // pred_check_branch
      %180 = sbr.rel (0) target = $region29
    $region28: #{tpu_custom_call.1} parent=1 // pred_region
      %182 = vsyncadd [#allocation4], 0
      %s184 = sshll.u32 [#allocation8], 4
      %s185 = int_to_ptr.vmem [resolvable:$true] %s184
      %s186 = sshll.u32 %s3, 4
      %s187 = int_to_ptr.hbm [resolvable:$true] %s186
      %189 = dma.vmem_to_hbm [thread:$0]  %s185, 384, %s187, [#allocation4]
    $region29: #{tpu_custom_call.1} parent=1 // pred_fallthru
      _
    // Predicated region
    $region30: #{tpu_custom_call.1} parent=1 // pred_check
      _
    $region31: #{tpu_custom_call.1} parent=1 // pred_check_branch
      %191 = sbr.rel (0) target = $region33
    $region32: #{tpu_custom_call.1} parent=1 // pred_region
      %193 = dma.done [#allocation4], 384
    $region33: #{tpu_custom_call.1} parent=1 // pred_fallthru
      _
    %194 = vsyncpa [#allocation3], 1
    %195 = vsyncpa [#allocation6], 1
    %196 = vsyncpa [#allocation4], 1

</llo_original>
